<compile_context>
chip_gen: v7x
topology: tpu7x:2x2x1
jax: 0.10.0
libtpu: 0.0.40
codegen_flags: <defaults>
</compile_context>

<pallas_src>
import functools

import jax
import jax.numpy as jnp
from jax.experimental import pallas as pl
from jax.experimental.pallas import tpu as pltpu


_LANE = 128


def _round_up(x, m):
    return (x + m - 1) // m * m


def _vmem_capacity_bytes():
    """Physical per-TC VMEM; conservative 64 MiB (v7x) if the query is unavailable."""
    try:
        info = pltpu.get_tpu_info()
        for name in ("vmem_capacity_bytes", "vmem_size_bytes", "vmem_bytes"):
            cap = getattr(info, name, None)
            if cap:
                return int(cap)
    except Exception:
        pass
    return 64 * 1024 * 1024


def _sigmoid(z):
    # Exact identity sigmoid(z) = 0.5*(tanh(z/2)+1); single EUP op per element.
    return 0.5 * (jnp.tanh(0.5 * z) + 1.0)


def _channel_attn_from_pools(max_pool, avg_pool, w1, w2):
    """(C,1),(C,1) pools -> (C,1) attention weights. One fc1 matmul, one fc2 matmul."""
    c = max_pool.shape[0]
    col = jax.lax.broadcasted_iota(jnp.int32, (c, 2), 1)
    pools = jnp.where(col == 0, max_pool, avg_pool)                       # (C, 2)
    h = jnp.maximum(jnp.dot(w1, pools, preferred_element_type=jnp.float32), 0.0)   # (Cr, 2)
    logits = jnp.dot(w2, h, preferred_element_type=jnp.float32)                    # (C, 2)
    z = jnp.sum(logits, axis=1, keepdims=True)                                     # (C, 1)
    return _sigmoid(z)


# --------------------------------------------------------------------------- #
# Fused per-batch path: grid=(B,), full (C, HW) slab per step, no padding.
# --------------------------------------------------------------------------- #
def _fused_kernel(x_ref, w1_ref, w2_ref, out_ref):
    # x_ref : (1, C, HW)   w1_ref: (Cr, C)   w2_ref: (C, Cr)
    x = x_ref[0].astype(jnp.float32)                              # (C, HW)
    hw = x.shape[1]

    max_pool = jnp.max(x, axis=1, keepdims=True)                  # (C, 1)
    avg_pool = jnp.sum(x, axis=1, keepdims=True) * (1.0 / hw)     # (C, 1)

    attn = _channel_attn_from_pools(
        max_pool, avg_pool,
        w1_ref[...].astype(jnp.float32),
        w2_ref[...].astype(jnp.float32))                          # (C, 1)

    out_ref[0] = _sigmoid(x * attn).astype(out_ref.dtype)


def _fused_forward(x_flat, w1, w2, *, vmem_limit, donate_x):
    b, c, hw = x_flat.shape
    cr = w1.shape[0]
    extra = {"input_output_aliases": {0: 0}} if donate_x else {}
    return pl.pallas_call(
        _fused_kernel,
        out_shape=jax.ShapeDtypeStruct((b, c, hw), x_flat.dtype),
        grid=(b,),
        in_specs=[
            pl.BlockSpec((1, c, hw), lambda i: (i, 0, 0)),
            pl.BlockSpec((cr, c), lambda i: (0, 0)),
            pl.BlockSpec((c, cr), lambda i: (0, 0)),
        ],
        out_specs=pl.BlockSpec((1, c, hw), lambda i: (i, 0, 0)),
        compiler_params=pltpu.CompilerParams(
            dimension_semantics=("parallel",),
            vmem_limit_bytes=vmem_limit,
        ),
        **extra,
    )(x_flat, w1, w2)


# --------------------------------------------------------------------------- #
# Two-pass fallback for large (C, HW):
#   pass 1 = HW-tiled pooling with (C,1) accumulators + fused FC/sigmoid epilogue
#   pass 2 = HW-tiled broadcast-multiply + final sigmoid
# --------------------------------------------------------------------------- #
def _pool_attn_kernel(x_ref, w1_ref, w2_ref, attn_ref, max_acc, sum_acc,
                      *, hw_true, needs_mask):
    t = pl.program_id(1)
    is_last = t == pl.num_programs(1) - 1

    @pl.when(t == 0)
    def _init():
        max_acc[...] = jnp.full(max_acc.shape, -jnp.inf, max_acc.dtype)
        sum_acc[...] = jnp.zeros(sum_acc.shape, sum_acc.dtype)

    x = x_ref[0].astype(jnp.float32)                              # (C, hw_tile)
    c, hw_tile = x.shape

    # Sum: padded columns are zero in HBM -> harmless.
    sum_acc[...] = sum_acc[...] + jnp.sum(x, axis=1, keepdims=True)

    # Max: only the final tile can contain padding; mask only there.
    if needs_mask:
        @pl.when(is_last)
        def _masked_max():
            col = jax.lax.broadcasted_iota(jnp.int32, (c, hw_tile), 1) + t * hw_tile
            xm = jnp.where(col < hw_true, x, -jnp.inf)
            max_acc[...] = jnp.maximum(max_acc[...], jnp.max(xm, axis=1, keepdims=True))

        @pl.when(jnp.logical_not(is_last))
        def _plain_max():
            max_acc[...] = jnp.maximum(max_acc[...], jnp.max(x, axis=1, keepdims=True))
    else:
        max_acc[...] = jnp.maximum(max_acc[...], jnp.max(x, axis=1, keepdims=True))

    @pl.when(is_last)
    def _finish():
        avg_pool = sum_acc[...] * (1.0 / hw_true)
        attn = _channel_attn_from_pools(
            max_acc[...], avg_pool,
            w1_ref[...].astype(jnp.float32),
            w2_ref[...].astype(jnp.float32))
        attn_ref[0] = attn.astype(attn_ref.dtype)


def _apply_kernel(x_ref, attn_ref, out_ref):
    x = x_ref[0].astype(jnp.float32)                              # (C, hw_tile)
    a = attn_ref[0].astype(jnp.float32)                           # (C, 1)
    out_ref[0] = _sigmoid(x * a).astype(out_ref.dtype)


def _pick_hw_tile(c, hw, tile_budget_bytes):
    """Largest lane-dense HW tile such that a (C, hw_tile) f32 block stays in budget."""
    max_cols = max(_LANE, (tile_budget_bytes // (c * 4)) // _LANE * _LANE)
    return min(_round_up(hw, _LANE), max_cols)


def _two_pass_forward(x_flat, w1, w2, hw_tile, *, vmem_limit, donate_x):
    b, c, hw_true = x_flat.shape
    cr = w1.shape[0]
    hw_pad = _round_up(hw_true, hw_tile)
    if hw_pad != hw_true:
        # Padding is only required here so the HW tiling divides evenly.
        x_flat = jnp.pad(x_flat, ((0, 0), (0, 0), (0, hw_pad - hw_true)))
    n_tiles = hw_pad // hw_tile
    needs_mask = hw_pad != hw_true

    # Pass 1: pooled max/avg + fused FC stack -> per-(b, c) attention weights.
    attn = pl.pallas_call(
        functools.partial(_pool_attn_kernel, hw_true=hw_true, needs_mask=needs_mask),
        out_shape=jax.ShapeDtypeStruct((b, c, 1), jnp.float32),
        grid=(b, n_tiles),
        in_specs=[
            pl.BlockSpec((1, c, hw_tile), lambda i, t: (i, 0, t)),
            pl.BlockSpec((cr, c), lambda i, t: (0, 0)),
            pl.BlockSpec((c, cr), lambda i, t: (0, 0)),
        ],
        out_specs=pl.BlockSpec((1, c, 1), lambda i, t: (i, 0, 0)),
        scratch_shapes=[
            pltpu.VMEM((c, 1), jnp.float32),   # running max
            pltpu.VMEM((c, 1), jnp.float32),   # running sum
        ],
        compiler_params=pltpu.CompilerParams(
            dimension_semantics=("parallel", "arbitrary"),
            vmem_limit_bytes=vmem_limit,
        ),
    )(x_flat, w1, w2)

    # Pass 2: broadcast-multiply + final sigmoid (both axes independent).
    extra = {"input_output_aliases": {0: 0}} if donate_x else {}
    out_pad = pl.pallas_call(
        _apply_kernel,
        out_shape=jax.ShapeDtypeStruct((b, c, hw_pad), x_flat.dtype),
        grid=(b, n_tiles),
        in_specs=[
            pl.BlockSpec((1, c, hw_tile), lambda i, t: (i, 0, t)),
            pl.BlockSpec((1, c, 1), lambda i, t: (i, 0, 0)),
        ],
        out_specs=pl.BlockSpec((1, c, hw_tile), lambda i, t: (i, 0, t)),
        compiler_params=pltpu.CompilerParams(
            dimension_semantics=("parallel", "parallel"),
            vmem_limit_bytes=vmem_limit,
        ),
        **extra,
    )(x_flat, attn)

    if hw_pad != hw_true:
        out_pad = out_pad[:, :, :hw_true]
    return out_pad


# --------------------------------------------------------------------------- #
# Public wrapper.
# --------------------------------------------------------------------------- #
def channel_attention_forward(x, w1, w2, *, force_two_pass=False, hw_tile=None,
                              donate_x=False):
    """x: (B, C, H, W).  w1: (C//ratio, C) = fc1.weight.  w2: (C, C//ratio) = fc2.weight."""
    b, c, h, w = x.shape
    hw = h * w
    x_flat = x.reshape(b, c, hw)          # free layout change (contiguous)

    # Generation-aware VMEM budgets (v7x: 64 MiB/TC, v5e/v6e: 128 MiB).
    vmem_cap = _vmem_capacity_bytes()
    vmem_limit = (vmem_cap * 7) // 8      # leave headroom for compiler scratch
    slab_budget = vmem_cap // 8           # per-batch (C, HW) f32 slab (fused path)
    tile_budget = vmem_cap // 8           # per (C, hw_tile) f32 block (two-pass path)

    use_fused = (not force_two_pass) and (c * hw * 4 <= slab_budget)

    if use_fused:
        out_flat = _fused_forward(x_flat, w1, w2, vmem_limit=vmem_limit,
                                  donate_x=donate_x)
    else:
        if hw_tile is None:
            hw_tile = _pick_hw_tile(c, hw, tile_budget)
        out_flat = _two_pass_forward(x_flat, w1, w2, hw_tile,
                                     vmem_limit=vmem_limit, donate_x=donate_x)

    return out_flat.reshape(b, c, h, w)


def reference_forward(x, w1, w2):
    # Pure-JAX reference mirroring the PyTorch module (including double sigmoid).
    max_pool = jnp.max(x, axis=(2, 3))
    avg_pool = jnp.mean(x, axis=(2, 3))
    h_max = jax.nn.relu(max_pool @ w1.T)
    h_avg = jax.nn.relu(avg_pool @ w1.T)
    attn = jax.nn.sigmoid(h_max @ w2.T + h_avg @ w2.T)
    out = x * attn[:, :, None, None]
    return jax.nn.sigmoid(out)


if __name__ == "__main__":
    key = jax.random.PRNGKey(0)
    k_x, k_w1, k_w2 = jax.random.split(key, 3)

    B, C, H, W = 2, 4, 16, 16
    ratio = 4
    Cr = max(1, C // ratio)

    x = jax.random.normal(k_x, (B, C, H, W), dtype=jnp.float32)
    w1 = jax.random.normal(k_w1, (Cr, C), dtype=jnp.float32) * 0.1   # fc1.weight
    w2 = jax.random.normal(k_w2, (C, Cr), dtype=jnp.float32) * 0.1   # fc2.weight

    ref = reference_forward(x, w1, w2)

    # Primary fused-per-batch path (no padding, single HBM read of x).
    out = jax.block_until_ready(channel_attention_forward(x, w1, w2))
    assert out.shape == (B, C, H, W)
    assert jnp.allclose(out, ref, atol=1e-5, rtol=1e-5), "fused path mismatch vs reference"

    # HW-tiled two-pass fallback path (exercised explicitly at the small shape).
    out_tiled = jax.block_until_ready(
        channel_attention_forward(x, w1, w2, force_two_pass=True, hw_tile=128))
    assert jnp.allclose(out_tiled, ref, atol=1e-5, rtol=1e-5), "tiled path mismatch vs reference"

    # Ragged spatial size (HW not a multiple of 128): fused path uses an
    # unpadded full-extent block; two-pass path exercises the masked-tail max.
    x2 = jax.random.normal(k_x, (B, C, 10, 10), dtype=jnp.float32)
    ref2 = reference_forward(x2, w1, w2)
    out2 = jax.block_until_ready(channel_attention_forward(x2, w1, w2))
    assert jnp.allclose(out2, ref2, atol=1e-5, rtol=1e-5), "fused ragged mismatch vs reference"
    out2_tiled = jax.block_until_ready(
        channel_attention_forward(x2, w1, w2, force_two_pass=True, hw_tile=128))
    assert jnp.allclose(out2_tiled, ref2, atol=1e-5, rtol=1e-5), "tiled ragged mismatch vs reference"

    print("KERNEL_OK")
</pallas_src>

<mosaic_0001>
module attributes {stable_mosaic.version = 11 : i64} {
  func.func @_fused_kernel(%arg0: i32, %arg1: memref<1x4x256xf32, #tpu.memory_space<vmem>>, %arg2: memref<1x4xf32, #tpu.memory_space<vmem>>, %arg3: memref<4x1xf32, #tpu.memory_space<vmem>>, %arg4: memref<1x4x256xf32, #tpu.memory_space<vmem>>) attributes {dimension_semantics = [#tpu.dimension_semantics<parallel>], iteration_bounds = array<i64: 2>, scalar_prefetch = 0 : i64, scratch_operands = 0 : i64, tpu.core_type = #tpu.core_type<tc>, window_params = [{transform_indices = @transform_0, window_bounds = array<i64: 1, 4, 256>}, {pipeline_mode = #tpu.pipeline_mode<synchronous>, transform_indices = @transform_1, window_bounds = array<i64: 1, 4>}, {pipeline_mode = #tpu.pipeline_mode<synchronous>, transform_indices = @transform_2, window_bounds = array<i64: 4, 1>}, {transform_indices = @transform_3, window_bounds = array<i64: 1, 4, 256>}]} {
    %c0 = arith.constant 0 : index
    %c0_0 = arith.constant 0 : index
    %c0_1 = arith.constant 0 : index
    %0 = vector.load %arg1[%c0, %c0_0, %c0_1] : memref<1x4x256xf32, #tpu.memory_space<vmem>>, vector<1x4x256xf32>
    %1 = vector.shape_cast %0 : vector<1x4x256xf32> to vector<4x256xf32>
    %cst = arith.constant dense<0xFF800000> : vector<4xf32>
    %2 = vector.multi_reduction <maximumf>, %1, %cst [1] : vector<4x256xf32> to vector<4xf32>
    %3 = vector.shape_cast %2 : vector<4xf32> to vector<4x1xf32>
    %cst_2 = arith.constant dense<0.000000e+00> : vector<4xf32>
    %4 = vector.multi_reduction <add>, %1, %cst_2 [1] : vector<4x256xf32> to vector<4xf32>
    %5 = vector.shape_cast %4 : vector<4xf32> to vector<4x1xf32>
    %cst_3 = arith.constant 3.906250e-03 : f32
    %6 = vector.broadcast %cst_3 : f32 to vector<4x1xf32>
    %7 = arith.mulf %5, %6 : vector<4x1xf32>
    %c0_4 = arith.constant 0 : index
    %c0_5 = arith.constant 0 : index
    %8 = vector.load %arg2[%c0_4, %c0_5] : memref<1x4xf32, #tpu.memory_space<vmem>>, vector<1x4xf32>
    %c0_6 = arith.constant 0 : index
    %c0_7 = arith.constant 0 : index
    %9 = vector.load %arg3[%c0_6, %c0_7] : memref<4x1xf32, #tpu.memory_space<vmem>>, vector<4x1xf32>
    %10 = tpu.iota {dimensions = array<i32: 1>} : vector<4x2xi32>
    %c0_i32 = arith.constant 0 : i32
    %11 = vector.broadcast %c0_i32 : i32 to vector<4x2xi32>
    %12 = arith.cmpi eq, %10, %11 : vector<4x2xi32>
    %13 = vector.shape_cast %3 : vector<4x1xf32> to vector<4x1xf32>
    %14 = vector.broadcast %13 : vector<4x1xf32> to vector<4x2xf32>
    %15 = vector.shape_cast %7 : vector<4x1xf32> to vector<4x1xf32>
    %16 = vector.broadcast %15 : vector<4x1xf32> to vector<4x2xf32>
    %17 = arith.select %12, %14, %16 : vector<4x2xi1>, vector<4x2xf32>
    %cst_8 = arith.constant dense<0.000000e+00> : vector<1x2xf32>
    %18 = tpu.matmul %8, %17, %cst_8 {dimension_numbers = #tpu.dot_dimension_numbers<[1], [0], [0], [1], [0, 0, 1, 1], [], []>} : vector<1x4xf32>, vector<4x2xf32>, vector<1x2xf32> -> vector<1x2xf32>
    %cst_9 = arith.constant 0.000000e+00 : f32
    %19 = vector.broadcast %cst_9 : f32 to vector<1x2xf32>
    %20 = arith.maximumf %18, %19 : vector<1x2xf32>
    %cst_10 = arith.constant dense<0.000000e+00> : vector<4x2xf32>
    %21 = tpu.matmul %9, %20, %cst_10 {dimension_numbers = #tpu.dot_dimension_numbers<[1], [0], [0], [1], [0, 0, 1, 1], [], []>} : vector<4x1xf32>, vector<1x2xf32>, vector<4x2xf32> -> vector<4x2xf32>
    %cst_11 = arith.constant dense<0.000000e+00> : vector<4xf32>
    %22 = vector.multi_reduction <add>, %21, %cst_11 [1] : vector<4x2xf32> to vector<4xf32>
    %23 = vector.shape_cast %22 : vector<4xf32> to vector<4x1xf32>
    %cst_12 = arith.constant 5.000000e-01 : f32
    %24 = vector.broadcast %cst_12 : f32 to vector<4x1xf32>
    %25 = arith.mulf %24, %23 : vector<4x1xf32>
    %26 = math.tanh %25 : vector<4x1xf32>
    %cst_13 = arith.constant 1.000000e+00 : f32
    %27 = vector.broadcast %cst_13 : f32 to vector<4x1xf32>
    %28 = arith.addf %26, %27 : vector<4x1xf32>
    %cst_14 = arith.constant 5.000000e-01 : f32
    %29 = vector.broadcast %cst_14 : f32 to vector<4x1xf32>
    %30 = arith.mulf %29, %28 : vector<4x1xf32>
    %31 = vector.broadcast %30 : vector<4x1xf32> to vector<4x256xf32>
    %32 = arith.mulf %1, %31 : vector<4x256xf32>
    %cst_15 = arith.constant 5.000000e-01 : f32
    %33 = vector.broadcast %cst_15 : f32 to vector<4x256xf32>
    %34 = arith.mulf %33, %32 : vector<4x256xf32>
    %35 = math.tanh %34 : vector<4x256xf32>
    %cst_16 = arith.constant 1.000000e+00 : f32
    %36 = vector.broadcast %cst_16 : f32 to vector<4x256xf32>
    %37 = arith.addf %35, %36 : vector<4x256xf32>
    %cst_17 = arith.constant 5.000000e-01 : f32
    %38 = vector.broadcast %cst_17 : f32 to vector<4x256xf32>
    %39 = arith.mulf %38, %37 : vector<4x256xf32>
    %c0_18 = arith.constant 0 : index
    %c0_19 = arith.constant 0 : index
    %c0_20 = arith.constant 0 : index
    %40 = vector.load %arg4[%c0_18, %c0_19, %c0_20] : memref<1x4x256xf32, #tpu.memory_space<vmem>>, vector<1x4x256xf32>
    %41 = vector.shape_cast %40 : vector<1x4x256xf32> to vector<4x256xf32>
    %42 = vector.shape_cast %39 : vector<4x256xf32> to vector<1x4x256xf32>
    tpu.vector_store %arg4[%c0_18, %c0_19, %c0_20], %42 {strides = array<i32>} : memref<1x4x256xf32, #tpu.memory_space<vmem>>, vector<1x4x256xf32>,
    return
  }
  func.func @transform_0(%arg0: i32) -> (i32, i32, i32) {
    %c0_i32 = arith.constant 0 : i32
    %c0_i32_0 = arith.constant 0 : i32
    %c0_i32_1 = arith.constant 0 : i32
    return %arg0, %c0_i32, %c0_i32_0 : i32, i32, i32
  }
  func.func @transform_1(%arg0: i32) -> (i32, i32) {
    %c0_i32 = arith.constant 0 : i32
    %c0_i32_0 = arith.constant 0 : i32
    %c0_i32_1 = arith.constant 0 : i32
    return %c0_i32, %c0_i32_0 : i32, i32
  }
  func.func @transform_2(%arg0: i32) -> (i32, i32) {
    %c0_i32 = arith.constant 0 : i32
    %c0_i32_0 = arith.constant 0 : i32
    %c0_i32_1 = arith.constant 0 : i32
    return %c0_i32, %c0_i32_0 : i32, i32
  }
  func.func @transform_3(%arg0: i32) -> (i32, i32, i32) {
    %c0_i32 = arith.constant 0 : i32
    %c0_i32_0 = arith.constant 0 : i32
    %c0_i32_1 = arith.constant 0 : i32
    return %arg0, %c0_i32, %c0_i32_0 : i32, i32, i32
  }
}

</mosaic_0001>

<llo_original>
// kernel: tpu_custom_call.1
$region0: #{tpu_custom_call.1}
  #allocation0 [shape = 'u32[]', space=smem, size = 0x4, offset = 0x4, fixed_abs, tag = 'smem constant byte address 0x4 - core index']
  #allocation1 [shape = 'u32[144,128]{1,0:T(1,128)}', space=vmem, size = 0x12000, scoped, tag = 'internal scratch']
  %s0 = inlined_call_operand.hbm [shape: f32[2,4,256], index: 0, kind: input, shape index: {}]
  %s1 = inlined_call_operand.vmem [shape: f32[1,4], index: 1, kind: input, shape index: {}]
  %s2 = inlined_call_operand.vmem [shape: f32[4,1], index: 2, kind: input, shape index: {}]
  %s3 = inlined_call_operand.hbm [shape: f32[2,4,256], index: 3, kind: output, shape index: {}]
  %s4 = sld [smem:[#allocation0]]
  $region49: #{tpu_custom_call.1} parent=0
    _
  %s6 = ssub.s32 1, %s4
  %s7 = scalar_select 0, %s6, %s4
  $region1: #{tpu_custom_call.1} parent=0
    #allocation2 [shape = 'u8[8192]{0}', space=vmem, size = 0x2000, scoped, tag = 'input window, operand 0']
    #allocation3 [shape = 's32[2]{0}', space=sflag, size = 0x8, scoped, tag = 'scoped memory for tpu_custom_call.1']
    #allocation4 [shape = 's32[2]{0}', space=sflag, size = 0x8, scoped, tag = 'scoped memory for tpu_custom_call.1']
    #allocation5 [shape = 'u8[8192]{0}', space=vmem, size = 0x2000, scoped, tag = 'output window, operand 0']
    %8 = vsyncpa [#allocation3], 0
    %s9 = scalar_lea.sflag [#allocation3], 1
    %10 = vsyncpa %s9, 0
    %11 = vsyncpa [#allocation4], 0
    %s12 = scalar_lea.sflag [#allocation4], 1
    %13 = vsyncpa %s12, 0
    loop: start=0, step=1, limit=4
    $region2: #{tpu_custom_call.1} parent=1 // loop_pre_header
      _
    $region3: #{tpu_custom_call.1} parent=1 // loop_header
      %s15 = sphi 0, %s19
      %p16 = scmp.ge.s32.totalorder %s15, 4
      %s25 = sphi 0, %s27
      %s28 = sphi 0, %s25
      %s29 = sphi 0, %s28
      %s45 = sphi 0, %s29
      %s49 = sphi 0, %s49
      %s51 = sphi 0, %s49
      %s52 = sphi 0, %s51
      %s66 = sphi 0, %s52
      %s70 = sphi 0, %s70
      %s72 = sphi 0, %s70
      %s73 = sphi 0, %s72
      %s87 = sphi 0, %s73
      %s93 = sphi 0, %s95
      %s96 = sphi 0, %s93
      %s97 = sphi 0, %s96
      %s113 = sphi 0, %s97
    $region4: #{tpu_custom_call.1} parent=1 // loop_header_branch
      %18 = sbr.rel (%p16) target = $region8
    $region5: #{tpu_custom_call.1} parent=1 // loop_body
      %s20 = ssub.s32 %s15, 1
      %s21 = ssub.s32 %s15, 2
      %s22 = sadd.s32 %s15, 1
      %s23 = ssub.s32 %s15, %s22
      %p24 = scmp.eq.s32.totalorder %s23, 0
      %s26 = sadd.s32 %s25, 1
      %s27 = scalar_select %p24, %s25, %s26
      %p30 = pneg %p24
      %p31 = scmp.eq.s32.totalorder %s15, 1
      %p32 = por %p30, %p31
      %p33 = scmp.ne.s32.totalorder %s25, %s28
      %p34 = scmp.eq.s32.totalorder %s15, 0
      %p35 = por %p33, %p34
      %p36 = scmp.ne.s32.totalorder %s25, %s28
      %p37 = scmp.eq.s32.totalorder %s20, 1
      %p38 = por %p36, %p37
      %p39 = scmp.ne.s32.totalorder %s28, %s29
      %p40 = scmp.eq.s32.totalorder %s20, 0
      %p41 = por %p39, %p40
      %p42 = scmp.ne.s32.totalorder %s28, %s29
      %p43 = scmp.eq.s32.totalorder %s21, 1
      %p44 = por %p42, %p43
      %p46 = scmp.ne.s32.totalorder %s29, %s45
      %p47 = scmp.eq.s32.totalorder %s21, 0
      %p48 = por %p46, %p47
      %s50 = sadd.s32 %s49, 1
      %p53 = scmp.eq.s32.totalorder %s15, 1
      %p54 = scmp.ne.s32.totalorder %s49, %s51
      %p55 = scmp.eq.s32.totalorder %s15, 0
      %p56 = por %p54, %p55
      %p57 = scmp.ne.s32.totalorder %s49, %s51
      %p58 = scmp.eq.s32.totalorder %s20, 1
      %p59 = por %p57, %p58
      %p60 = scmp.ne.s32.totalorder %s51, %s52
      %p61 = scmp.eq.s32.totalorder %s20, 0
      %p62 = por %p60, %p61
      %p63 = scmp.ne.s32.totalorder %s51, %s52
      %p64 = scmp.eq.s32.totalorder %s21, 1
      %p65 = por %p63, %p64
      %p67 = scmp.ne.s32.totalorder %s52, %s66
      %p68 = scmp.eq.s32.totalorder %s21, 0
      %p69 = por %p67, %p68
      %s71 = sadd.s32 %s70, 1
      %p74 = scmp.eq.s32.totalorder %s15, 1
      %p75 = scmp.ne.s32.totalorder %s70, %s72
      %p76 = scmp.eq.s32.totalorder %s15, 0
      %p77 = por %p75, %p76
      %p78 = scmp.ne.s32.totalorder %s70, %s72
      %p79 = scmp.eq.s32.totalorder %s20, 1
      %p80 = por %p78, %p79
      %p81 = scmp.ne.s32.totalorder %s72, %s73
      %p82 = scmp.eq.s32.totalorder %s20, 0
      %p83 = por %p81, %p82
      %p84 = scmp.ne.s32.totalorder %s72, %s73
      %p85 = scmp.eq.s32.totalorder %s21, 1
      %p86 = por %p84, %p85
      %p88 = scmp.ne.s32.totalorder %s73, %s87
      %p89 = scmp.eq.s32.totalorder %s21, 0
      %p90 = por %p88, %p89
      %s91 = ssub.s32 %s15, %s22
      %p92 = scmp.eq.s32.totalorder %s91, 0
      %s94 = sadd.s32 %s93, 1
      %s95 = scalar_select %p92, %s93, %s94
      %p98 = pneg %p92
      %p99 = scmp.eq.s32.totalorder %s15, 1
      %p100 = por %p98, %p99
      %p101 = scmp.ne.s32.totalorder %s93, %s96
      %p102 = scmp.eq.s32.totalorder %s15, 0
      %p103 = por %p101, %p102
      %p104 = scmp.ne.s32.totalorder %s93, %s96
      %p105 = scmp.eq.s32.totalorder %s20, 1
      %p106 = por %p104, %p105
      %p107 = scmp.ne.s32.totalorder %s96, %s97
      %p108 = scmp.eq.s32.totalorder %s20, 0
      %p109 = por %p107, %p108
      %p110 = scmp.ne.s32.totalorder %s96, %s97
      %p111 = scmp.eq.s32.totalorder %s21, 1
      %p112 = por %p110, %p111
      %p114 = scmp.ne.s32.totalorder %s97, %s113
      %p115 = scmp.eq.s32.totalorder %s21, 0
      %p116 = por %p114, %p115
      %p117 = scmp.le.s32.totalorder 1, %s15
      %p118 = scmp.lt.s32.totalorder %s15, 3
      %p119 = pnand %p117, %p118
      %p120 = pneg %p119
      // Predicated region
      $region9: #{tpu_custom_call.1} parent=5 // pred_check
        _
      $region10: #{tpu_custom_call.1} parent=5 // pred_check_branch
        %122 = sbr.rel (%p119) target = $region12
      $region11: #{tpu_custom_call.1} parent=5 // pred_region
        %s123 = ssub.s32 %s15, 1
        // Predicated region
        $region13: #{tpu_custom_call.1} parent=11 // pred_check
          %p124 = pneg %p62
        $region14: #{tpu_custom_call.1} parent=11 // pred_check_branch
          %126 = sbr.rel (%p124) target = $region16
        $region15: #{tpu_custom_call.1} parent=11 // pred_region
          _
        $region16: #{tpu_custom_call.1} parent=11 // pred_fallthru
          _
        // Predicated region
        $region17: #{tpu_custom_call.1} parent=11 // pred_check
          %p127 = pneg %p83
        $region18: #{tpu_custom_call.1} parent=11 // pred_check_branch
          %129 = sbr.rel (%p127) target = $region20
        $region19: #{tpu_custom_call.1} parent=11 // pred_region
          _
        $region20: #{tpu_custom_call.1} parent=11 // pred_fallthru
          _
      $region12: #{tpu_custom_call.1} parent=5 // pred_fallthru
        _
      %p130 = scmp.lt.s32.totalorder %s15, 2
      // Predicated region
      $region21: #{tpu_custom_call.1} parent=5 // pred_check
        %p131 = pneg %p130
      $region22: #{tpu_custom_call.1} parent=5 // pred_check_branch
        %133 = sbr.rel (%p131) target = $region24
      $region23: #{tpu_custom_call.1} parent=5 // pred_region
        // Predicated region
        $region25: #{tpu_custom_call.1} parent=23 // pred_check
          %p134 = pneg %p35
        $region26: #{tpu_custom_call.1} parent=23 // pred_check_branch
          %136 = sbr.rel (%p134) target = $region28
        $region27: #{tpu_custom_call.1} parent=23 // pred_region
          %s137 = sand.u32 %s25, 1
          %s138 = scalar_lea.sflag [#allocation3], %s137
          %s139 = sand.u32 %s25, 1
          %s140 = smul.addr %s139, 8
          %s141 = scalar_lea.vmem [#allocation2], %s140
          %s143 = ssub.s32 128, 128
          %144 = vsyncadd %s138, %s143
          %s145 = smul.addr %s15, 2
          %s146 = smul.addr %s145, 64
          %s147 = scalar_lea.hbm %s0, %s146
          %s149 = sshll.u32 %s141, 4
          %s150 = int_to_ptr.vmem [resolvable:$true] %s149
          %152 = dma.hbm_to_vmem [thread:$0]  %s147, 128, %s150, %s138
        $region28: #{tpu_custom_call.1} parent=23 // pred_fallthru
          _
      $region24: #{tpu_custom_call.1} parent=5 // pred_fallthru
        _
      %p153 = scmp.le.s32.totalorder 1, %s15
      %p154 = scmp.lt.s32.totalorder %s15, 3
      %p155 = pnand %p153, %p154
      %p156 = pneg %p155
      // Predicated region
      $region29: #{tpu_custom_call.1} parent=5 // pred_check
        _
      $region30: #{tpu_custom_call.1} parent=5 // pred_check_branch
        %158 = sbr.rel (%p155) target = $region32
      $region31: #{tpu_custom_call.1} parent=5 // pred_region
        %s159 = ssub.s32 %s15, 1
        %s160 = sand.u32 %s28, 1
        %s161 = scalar_lea.sflag [#allocation3], %s160
        %s162 = sand.u32 %s28, 1
        %s163 = smul.addr %s162, 8
        %s164 = scalar_lea.vmem [#allocation2], %s163
        // Predicated region
        $region33: #{tpu_custom_call.1} parent=31 // pred_check
          %p165 = pneg %p41
        $region34: #{tpu_custom_call.1} parent=31 // pred_check_branch
          %167 = sbr.rel (%p165) target = $region36
        $region35: #{tpu_custom_call.1} parent=31 // pred_region
          %168 = dma.done %s161, 128
        $region36: #{tpu_custom_call.1} parent=31 // pred_fallthru
          _
        %s169 = sand.u32 %s28, 1
        %s170 = scalar_lea.sflag [#allocation3], %s169
        %s171 = sand.u32 %s28, 1
        %s172 = smul.addr %s171, 8
        %s173 = scalar_lea.vmem [#allocation2], %s172
        %p174 = pneg %p41
        %p175 = pneg %p38
        %p176 = pneg %p62
        %p177 = pneg %p59
        %p178 = pneg %p83
        %p179 = pneg %p80
        %p180 = pneg %p109
        %p181 = pneg %p106
        %s182 = sand.u32 %s96, 1
        %s183 = scalar_lea.sflag [#allocation4], %s182
        %s184 = sand.u32 %s96, 1
        %s185 = smul.addr %s184, 8
        %s186 = scalar_lea.vmem [#allocation5], %s185
        %v187 = vld [vmem:[%s164] sm:$0xff]
        %v189 = vcombine.high %v187, %v187
        %vm191 = vcmask 1043456
        %v192 = vsel %vm191, %v187, -inf
        %v193 = vsel %vm191, %v189, -inf
        %v194 = vmax.f32 %v192, %v193
        %195 = vmax.xlane.f32.xlu0 %v194
        %v196 = vpop.xlane.xlu0 %195
        %v197 = vsel %vm191, %v187, 0.0
        %v198 = vsel %vm191, %v189, 0.0
        %v199 = vadd.f32 %v197, %v198
        %200 = vadd.xlane.f32.xlu0 %v199
        %v201 = vpop.xlane.xlu0 %200
        %v202 = vmul.f32 %v201, 0.00390625
        %v203 = vld [vmem:[%s1] sm:$0x1]
        %v204 = vld [vmem:[%s2] sm:$0xf]
        %v205 = vlaneseq
        %v206 = vand.u32 %v205, 127
        %vm207 = vcmp.eq.s32.totalorder %v206, 0
        %v208 = vsel %vm207, %v196, %v202
        %vm209 = vcmask 31744
        %v211 = vsel %vm209, %v203, 0
        %v214 = vsel %vm191, %v208, 0
        %216 = vmatprep.subr.mxu0 0.0
        %217 = vmatpush1.msra.mxu0 %v214
        %218 = vmatprep.subr.mxu0 0.0
        %219 = vmatpush1.msra.mxu0 0.0
        %220 = vmatprep.subr.mxu0 0.0
        %221 = vmatpush1.msra.mxu0 0.0
        %222 = vmatprep.subr.mxu0 0.0
        %223 = vmatpush1.msra.mxu0 0.0
        %224 = vmatprep.subr.mxu0 0.0
        %225 = vmatpush1.msra.mxu0 0.0
        %226 = vmatprep.subr.mxu0 0.0
        %227 = vmatpush1.msra.mxu0 0.0
        %228 = vmatprep.subr.mxu0 0.0
        %229 = vmatpush1.msra.mxu0 0.0
        %230 = vmatprep.subr.mxu0 0.0
        %231 = vmatpush1.msra.mxu0 0.0
        %232 = vmatprep.subr.mxu0 0.0
        %233 = vmatpush1.msra.mxu0 0.0
        %234 = vmatprep.subr.mxu0 0.0
        %235 = vmatpush1.msra.mxu0 0.0
        %236 = vmatprep.subr.mxu0 0.0
        %237 = vmatpush1.msra.mxu0 0.0
        %238 = vmatprep.subr.mxu0 0.0
        %239 = vmatpush1.msra.mxu0 0.0
        %240 = vmatprep.subr.mxu0 0.0
        %241 = vmatpush1.msra.mxu0 0.0
        %242 = vmatprep.subr.mxu0 0.0
        %243 = vmatpush1.msra.mxu0 0.0
        %244 = vmatprep.subr.mxu0 0.0
        %245 = vmatpush1.msra.mxu0 0.0
        %246 = vmatprep.subr.mxu0 0.0
        %247 = vmatpush1.msra.mxu0 0.0
        %248 = vmatprep.subr.mxu0 0.0
        %249 = vmatpush1.msra.mxu0 0.0
        %250 = vmatprep.subr.mxu0 0.0
        %251 = vmatpush1.msra.mxu0 0.0
        %252 = vmatprep.subr.mxu0 0.0
        %253 = vmatpush1.msra.mxu0 0.0
        %254 = vmatprep.subr.mxu0 0.0
        %255 = vmatpush1.msra.mxu0 0.0
        %256 = vmatprep.subr.mxu0 0.0
        %257 = vmatpush1.msra.mxu0 0.0
        %258 = vmatprep.subr.mxu0 0.0
        %259 = vmatpush1.msra.mxu0 0.0
        %260 = vmatprep.subr.mxu0 0.0
        %261 = vmatpush1.msra.mxu0 0.0
        %262 = vmatprep.subr.mxu0 0.0
        %263 = vmatpush1.msra.mxu0 0.0
        %264 = vmatprep.subr.mxu0 0.0
        %265 = vmatpush1.msra.mxu0 0.0
        %266 = vmatprep.subr.mxu0 0.0
        %267 = vmatpush1.msra.mxu0 0.0
        %268 = vmatprep.subr.mxu0 0.0
        %269 = vmatpush1.msra.mxu0 0.0
        %270 = vmatprep.subr.mxu0 0.0
        %271 = vmatpush1.msra.mxu0 0.0
        %272 = vmatprep.subr.mxu0 0.0
        %273 = vmatpush1.msra.mxu0 0.0
        %274 = vmatprep.subr.mxu0 0.0
        %275 = vmatpush1.msra.mxu0 0.0
        %276 = vmatprep.subr.mxu0 0.0
        %277 = vmatpush1.msra.mxu0 0.0
        %278 = vmatprep.subr.mxu0 0.0
        %279 = vmatpush1.msra.mxu0 0.0
        %280 = vmatprep.mubr.f32.mxu0 0.0
        %281 = vmatmul.mubr.f32.gmra.mrb[0].mxu0 %v211
        %v282 = vpop.f32.mrb[0].mxu0
        %v283 = vadd.f32 0.0, %v282
        %v284 = vpop.f32.mrb[0].mxu0
        %285 = vdwg.mxu0
        %v286 = vmax.f32 %v283, 0.0
        %vm287 = vcmask 7168
        %v289 = vsel %vm287, %v204, 0
        %vm291 = vcmask 1040384
        %v293 = vsel %vm291, %v286, 0
        %295 = vmatprep.subr.mxu0 0.0
        %296 = vmatpush1.msra.mxu0 %v293
        %297 = vmatprep.subr.mxu0 0.0
        %298 = vmatpush1.msra.mxu0 0.0
        %299 = vmatprep.subr.mxu0 0.0
        %300 = vmatpush1.msra.mxu0 0.0
        %301 = vmatprep.subr.mxu0 0.0
        %302 = vmatpush1.msra.mxu0 0.0
        %303 = vmatprep.subr.mxu0 0.0
        %304 = vmatpush1.msra.mxu0 0.0
        %305 = vmatprep.subr.mxu0 0.0
        %306 = vmatpush1.msra.mxu0 0.0
        %307 = vmatprep.subr.mxu0 0.0
        %308 = vmatpush1.msra.mxu0 0.0
        %309 = vmatprep.subr.mxu0 0.0
        %310 = vmatpush1.msra.mxu0 0.0
        %311 = vmatprep.subr.mxu0 0.0
        %312 = vmatpush1.msra.mxu0 0.0
        %313 = vmatprep.subr.mxu0 0.0
        %314 = vmatpush1.msra.mxu0 0.0
        %315 = vmatprep.subr.mxu0 0.0
        %316 = vmatpush1.msra.mxu0 0.0
        %317 = vmatprep.subr.mxu0 0.0
        %318 = vmatpush1.msra.mxu0 0.0
        %319 = vmatprep.subr.mxu0 0.0
        %320 = vmatpush1.msra.mxu0 0.0
        %321 = vmatprep.subr.mxu0 0.0
        %322 = vmatpush1.msra.mxu0 0.0
        %323 = vmatprep.subr.mxu0 0.0
        %324 = vmatpush1.msra.mxu0 0.0
        %325 = vmatprep.subr.mxu0 0.0
        %326 = vmatpush1.msra.mxu0 0.0
        %327 = vmatprep.subr.mxu0 0.0
        %328 = vmatpush1.msra.mxu0 0.0
        %329 = vmatprep.subr.mxu0 0.0
        %330 = vmatpush1.msra.mxu0 0.0
        %331 = vmatprep.subr.mxu0 0.0
        %332 = vmatpush1.msra.mxu0 0.0
        %333 = vmatprep.subr.mxu0 0.0
        %334 = vmatpush1.msra.mxu0 0.0
        %335 = vmatprep.subr.mxu0 0.0
        %336 = vmatpush1.msra.mxu0 0.0
        %337 = vmatprep.subr.mxu0 0.0
        %338 = vmatpush1.msra.mxu0 0.0
        %339 = vmatprep.subr.mxu0 0.0
        %340 = vmatpush1.msra.mxu0 0.0
        %341 = vmatprep.subr.mxu0 0.0
        %342 = vmatpush1.msra.mxu0 0.0
        %343 = vmatprep.subr.mxu0 0.0
        %344 = vmatpush1.msra.mxu0 0.0
        %345 = vmatprep.subr.mxu0 0.0
        %346 = vmatpush1.msra.mxu0 0.0
        %347 = vmatprep.subr.mxu0 0.0
        %348 = vmatpush1.msra.mxu0 0.0
        %349 = vmatprep.subr.mxu0 0.0
        %350 = vmatpush1.msra.mxu0 0.0
        %351 = vmatprep.subr.mxu0 0.0
        %352 = vmatpush1.msra.mxu0 0.0
        %353 = vmatprep.subr.mxu0 0.0
        %354 = vmatpush1.msra.mxu0 0.0
        %355 = vmatprep.subr.mxu0 0.0
        %356 = vmatpush1.msra.mxu0 0.0
        %357 = vmatprep.subr.mxu0 0.0
        %358 = vmatpush1.msra.mxu0 0.0
        %359 = vmatprep.mubr.f32.mxu0 0.0
        %360 = vmatmul.mubr.f32.gmra.mrb[0].mxu0 %v289
        %v361 = vpop.f32.mrb[0].mxu0
        %v362 = vadd.f32 0.0, %v361
        %v363 = vpop.f32.mrb[0].mxu0
        %364 = vdwg.mxu0
        %vm365 = vcmask 11264
        %v366 = vsel %vm365, %v362, 0.0
        %367 = vadd.xlane.f32.xlu0 %v366
        %v368 = vpop.xlane.xlu0 %367
        %v369 = vmul.f32 %v368, 0.5
        %v370 = vtanh.pop %v369
        %v371 = vadd.f32 %v370, 1.0
        %v372 = vmul.f32 %v371, 0.5
        %v375 = vunpack.c.l.s4 839922192
        %v376 = vunpack.c.0.s8 %v375
        %v377 = vlaneseq
        %v378 = vshrl.u32 %v377, 7
        %v379 = vsub.s32 %v376, %v378
        %v380 = vrot.slane %v372, %v379
        %v382 = vmul.f32 %v187, %v380
        %v383 = vmul.f32 %v382, 0.5
        %v384 = vtanh.pop %v383
        %v385 = vadd.f32 %v384, 1.0
        %v386 = vmul.f32 %v385, 0.5
        %387 = vst [vmem:[%s186] sm:$0xff] %v386
        %s388 = sand.u32 %s96, 1
        %s389 = scalar_lea.sflag [#allocation4], %s388
        %s390 = sand.u32 %s96, 1
        %s391 = smul.addr %s390, 8
        %s392 = scalar_lea.vmem [#allocation5], %s391
        // Predicated region
        $region37: #{tpu_custom_call.1} parent=31 // pred_check
          %p393 = pneg %p106
        $region38: #{tpu_custom_call.1} parent=31 // pred_check_branch
          %395 = sbr.rel (%p393) target = $region40
        $region39: #{tpu_custom_call.1} parent=31 // pred_region
          %s397 = ssub.s32 128, 128
          %398 = vsyncadd %s389, %s397
          %s399 = smul.addr %s20, 2
          %s400 = smul.addr %s399, 64
          %s401 = scalar_lea.hbm %s3, %s400
          %s403 = sshll.u32 %s392, 4
          %s404 = int_to_ptr.vmem [resolvable:$true] %s403
          %406 = dma.vmem_to_hbm [thread:$0]  %s404, 128, %s401, %s389
        $region40: #{tpu_custom_call.1} parent=31 // pred_fallthru
          _
      $region32: #{tpu_custom_call.1} parent=5 // pred_fallthru
        _
      %p407 = scmp.le.s32.totalorder 2, %s15
      // Predicated region
      $region41: #{tpu_custom_call.1} parent=5 // pred_check
        %p408 = pneg %p407
      $region42: #{tpu_custom_call.1} parent=5 // pred_check_branch
        %410 = sbr.rel (%p408) target = $region44
      $region43: #{tpu_custom_call.1} parent=5 // pred_region
        %s411 = ssub.s32 %s15, 2
        // Predicated region
        $region45: #{tpu_custom_call.1} parent=43 // pred_check
          %p412 = pneg %p112
        $region46: #{tpu_custom_call.1} parent=43 // pred_check_branch
          %414 = sbr.rel (%p412) target = $region48
        $region47: #{tpu_custom_call.1} parent=43 // pred_region
          %s415 = sand.u32 %s97, 1
          %s416 = scalar_lea.sflag [#allocation4], %s415
          %s417 = sand.u32 %s97, 1
          %s418 = smul.addr %s417, 8
          %s419 = scalar_lea.vmem [#allocation5], %s418
          %420 = dma.done %s416, 128
        $region48: #{tpu_custom_call.1} parent=43 // pred_fallthru
          _
      $region44: #{tpu_custom_call.1} parent=5 // pred_fallthru
        _
    $region6: #{tpu_custom_call.1} parent=1 // loop_footer
      %s19 = sadd.s32 1, %s15
    $region7: #{tpu_custom_call.1} parent=1 // loop_footer_branch
      %14 = sbr.rel target = $region3
    $region8: #{tpu_custom_call.1} parent=1 // loop_exit
      _
    %421 = vsyncpa [#allocation3], 1
    %s422 = scalar_lea.sflag [#allocation3], 1
    %423 = vsyncpa %s422, 1
    %424 = vsyncpa [#allocation4], 1
    %s425 = scalar_lea.sflag [#allocation4], 1
    %426 = vsyncpa %s425, 1

</llo_original>
